<compile_context>
chip_gen: v6e
topology: v6e:2x2x1
jax: 0.10.0
libtpu: 0.0.40
codegen_flags: <defaults>
</compile_context>

<pallas_src>
import math
import functools

import jax
import jax.numpy as jnp
from jax.experimental import pallas as pl
from jax.experimental.pallas import tpu as pltpu

HIDDEN = 32
DEFAULT_BLOCK_ROWS = 8192   # max original-batch rows per grid step


def _round_up(a, m):
    return ((a + m - 1) // m) * m


def _choose_group(in_size):
    """Row-grouping factor g: pack g input rows into one kernel row (g*in_size <= 128)."""
    g = 1
    while g < 8 and 2 * g * in_size <= 128:
        g *= 2
    return g


def _block_diag(w, g):
    """(k, n) -> (g*k, g*n) block-diagonal replication of w."""
    k, n = w.shape
    eye = jnp.eye(g, dtype=w.dtype)
    return jnp.einsum('ij,kn->ikjn', eye, w).reshape(g * k, g * n)


def mlp_kernel(x_ref, w1_ref, b1_ref, w2_ref, b2_ref, o_ref):
    # x arrives as f32; cast to bf16 on the VPU right before the MXU matmul
    # (free under the memory-bound regime, avoids a separate wrapper cast pass).
    x = x_ref[...].astype(jnp.bfloat16)
    h = jnp.dot(x, w1_ref[...], preferred_element_type=jnp.float32)
    h = jnp.maximum(h + b1_ref[...], 0.0)                       # bias + ReLU, f32 VPU
    logits = jnp.dot(h.astype(jnp.bfloat16), w2_ref[...],
                     preferred_element_type=jnp.float32)
    logits = logits + b2_ref[...]
    o_ref[...] = jax.nn.sigmoid(logits) - 0.4                   # EUP exp + VPU


@functools.partial(jax.jit, static_argnames=("block_rows",))
def neural_network_forward(x, w1, b1, w2, b2, *, block_rows=DEFAULT_BLOCK_ROWS):
    """x: [B, input_size]. Returns [B, output_size] float32."""
    B, in_size = x.shape
    hidden = w1.shape[1]
    out_size = w2.shape[1]

    g = _choose_group(in_size)

    # Only pads (one extra copy of x) when B % g != 0; padded rows are sliced off.
    Bp = _round_up(B, g)
    if Bp != B:
        x = jnp.pad(x, ((0, Bp - B), (0, 0)))
    Bg = Bp // g

    # Free, contiguous row-major regroup: g rows of in_size -> one row of g*in_size.
    xg = x.astype(jnp.float32).reshape(Bg, g * in_size)

    # Block-diagonal weight replicas: identical math, lane-dense kernel input/output.
    w1_big = _block_diag(w1, g).astype(jnp.bfloat16)            # (g*in, g*hidden)
    w2_big = _block_diag(w2, g).astype(jnp.bfloat16)            # (g*hidden, g*out)
    b1_big = jnp.tile(b1.astype(jnp.float32), g).reshape(1, g * hidden)
    b2_big = jnp.tile(b2.astype(jnp.float32), g).reshape(1, g * out_size)

    # Grouped-batch tile: as large as block_rows allows, multiple of 8 sublanes,
    # capped so the grid keeps >= 2 steps (both v7x TensorCores busy) when possible.
    max_tbg = max(8, block_rows // g)
    if Bg <= 8:
        tbg = Bg                       # single (possibly sub-8) block == full dim
    else:
        tbg = min(max_tbg, _round_up(pl.cdiv(Bg, 2), 8))
    grid_bg = pl.cdiv(Bg, tbg)

    flops = 2 * Bp * g * (in_size * hidden + hidden * out_size)   # grouped MXU flops
    bytes_accessed = (xg.size * 4 + Bg * g * out_size * 4
                      + w1_big.size * 2 + w2_big.size * 2
                      + b1_big.size * 4 + b2_big.size * 4)

    out_g = pl.pallas_call(
        mlp_kernel,
        out_shape=jax.ShapeDtypeStruct((Bg, g * out_size), jnp.float32),
        grid=(grid_bg,),
        in_specs=[
            pl.BlockSpec((tbg, g * in_size), lambda i: (i, 0)),          # x tile
            pl.BlockSpec((g * in_size, g * hidden), lambda i: (0, 0)),   # W1 (resident)
            pl.BlockSpec((1, g * hidden), lambda i: (0, 0)),             # b1
            pl.BlockSpec((g * hidden, g * out_size), lambda i: (0, 0)),  # W2 (resident)
            pl.BlockSpec((1, g * out_size), lambda i: (0, 0)),           # b2
        ],
        out_specs=pl.BlockSpec((tbg, g * out_size), lambda i: (i, 0)),
        compiler_params=pltpu.CompilerParams(
            dimension_semantics=("parallel",)),
        cost_estimate=pl.CostEstimate(
            flops=flops,
            transcendentals=Bp * out_size,
            bytes_accessed=bytes_accessed),
    )(xg, w1_big, b1_big, w2_big, b2_big)

    out = out_g.reshape(Bp, out_size)     # free ungrouping reshape
    return out[:B] if Bp != B else out


def init_params(key, input_size, output_size):
    """Deterministic init mirroring torch.nn.Linear default U[-1/sqrt(fan_in), ...].
    Weights returned as [in, out] (transposed vs torch's [out, in])."""
    k1, k2, k3, k4 = jax.random.split(key, 4)
    bound1 = 1.0 / math.sqrt(input_size)
    bound2 = 1.0 / math.sqrt(HIDDEN)
    w1 = jax.random.uniform(k1, (input_size, HIDDEN), jnp.float32, -bound1, bound1)
    b1 = jax.random.uniform(k2, (HIDDEN,), jnp.float32, -bound1, bound1)
    w2 = jax.random.uniform(k3, (HIDDEN, output_size), jnp.float32, -bound2, bound2)
    b2 = jax.random.uniform(k4, (output_size,), jnp.float32, -bound2, bound2)
    return w1, b1, w2, b2


def _reference(x, w1, b1, w2, b2):
    return jax.nn.sigmoid(jnp.maximum(x @ w1 + b1, 0.0) @ w2 + b2) - 0.4


if __name__ == "__main__":
    input_size = 16
    output_size = 4

    key = jax.random.PRNGKey(0)
    kx, kp = jax.random.split(key)
    w1, b1, w2, b2 = init_params(kp, input_size, output_size)

    # Small case (single grid step, grouped batch of 1).
    batch = 8
    x = jax.random.normal(kx, (batch, input_size), jnp.float32)
    out = jax.block_until_ready(neural_network_forward(x, w1, b1, w2, b2))
    ref = _reference(x, w1, b1, w2, b2)
    assert out.shape == (batch, output_size)
    assert jnp.allclose(out, ref, atol=2e-2), "mismatch vs reference (small batch)"

    # Larger case exercising grouping, tail padding, multi-step grid + partial block.
    batch2 = 300
    x2 = jax.random.normal(kx, (batch2, input_size), jnp.float32)
    out2 = jax.block_until_ready(
        neural_network_forward(x2, w1, b1, w2, b2, block_rows=128))
    ref2 = _reference(x2, w1, b1, w2, b2)
    assert out2.shape == (batch2, output_size)
    assert jnp.allclose(out2, ref2, atol=2e-2), "mismatch vs reference (tiled batch)"

    print("KERNEL_OK")
</pallas_src>

<mosaic_0001>
module attributes {stable_mosaic.version = 11 : i64} {
  func.func @mlp_kernel(%arg0: i32, %arg1: memref<1x128xf32, #tpu.memory_space<vmem>>, %arg2: memref<128x256xbf16, #tpu.memory_space<vmem>>, %arg3: memref<1x256xf32, #tpu.memory_space<vmem>>, %arg4: memref<256x32xbf16, #tpu.memory_space<vmem>>, %arg5: memref<1x32xf32, #tpu.memory_space<vmem>>, %arg6: memref<1x32xf32, #tpu.memory_space<vmem>>) attributes {dimension_semantics = [#tpu.dimension_semantics<parallel>], iteration_bounds = array<i64: 1>, scalar_prefetch = 0 : i64, scratch_operands = 0 : i64, tpu.core_type = #tpu.core_type<tc>, window_params = [{transform_indices = @transform_0, window_bounds = array<i64: 1, 128>}, {pipeline_mode = #tpu.pipeline_mode<synchronous>, transform_indices = @transform_1, window_bounds = array<i64: 128, 256>}, {pipeline_mode = #tpu.pipeline_mode<synchronous>, transform_indices = @transform_2, window_bounds = array<i64: 1, 256>}, {pipeline_mode = #tpu.pipeline_mode<synchronous>, transform_indices = @transform_3, window_bounds = array<i64: 256, 32>}, {pipeline_mode = #tpu.pipeline_mode<synchronous>, transform_indices = @transform_4, window_bounds = array<i64: 1, 32>}, {transform_indices = @transform_5, window_bounds = array<i64: 1, 32>}]} {
    %c0 = arith.constant 0 : index
    %c0_0 = arith.constant 0 : index
    %0 = vector.load %arg1[%c0, %c0_0] : memref<1x128xf32, #tpu.memory_space<vmem>>, vector<1x128xf32>
    %1 = arith.truncf %0 : vector<1x128xf32> to vector<1x128xbf16>
    %c0_1 = arith.constant 0 : index
    %c0_2 = arith.constant 0 : index
    %2 = vector.load %arg2[%c0_1, %c0_2] : memref<128x256xbf16, #tpu.memory_space<vmem>>, vector<128x256xbf16>
    %cst = arith.constant dense<0.000000e+00> : vector<1x256xf32>
    %3 = tpu.matmul %1, %2, %cst {dimension_numbers = #tpu.dot_dimension_numbers<[1], [0], [0], [1], [0, 0, 1, 1], [], []>} : vector<1x128xbf16>, vector<128x256xbf16>, vector<1x256xf32> -> vector<1x256xf32>
    %c0_3 = arith.constant 0 : index
    %c0_4 = arith.constant 0 : index
    %4 = vector.load %arg3[%c0_3, %c0_4] : memref<1x256xf32, #tpu.memory_space<vmem>>, vector<1x256xf32>
    %5 = arith.addf %3, %4 : vector<1x256xf32>
    %cst_5 = arith.constant 0.000000e+00 : f32
    %6 = vector.broadcast %cst_5 : f32 to vector<1x256xf32>
    %7 = arith.maximumf %5, %6 : vector<1x256xf32>
    %8 = arith.truncf %7 : vector<1x256xf32> to vector<1x256xbf16>
    %c0_6 = arith.constant 0 : index
    %c0_7 = arith.constant 0 : index
    %9 = vector.load %arg4[%c0_6, %c0_7] : memref<256x32xbf16, #tpu.memory_space<vmem>>, vector<256x32xbf16>
    %cst_8 = arith.constant dense<0.000000e+00> : vector<1x32xf32>
    %10 = tpu.matmul %8, %9, %cst_8 {dimension_numbers = #tpu.dot_dimension_numbers<[1], [0], [0], [1], [0, 0, 1, 1], [], []>} : vector<1x256xbf16>, vector<256x32xbf16>, vector<1x32xf32> -> vector<1x32xf32>
    %c0_9 = arith.constant 0 : index
    %c0_10 = arith.constant 0 : index
    %11 = vector.load %arg5[%c0_9, %c0_10] : memref<1x32xf32, #tpu.memory_space<vmem>>, vector<1x32xf32>
    %12 = arith.addf %10, %11 : vector<1x32xf32>
    %13 = arith.negf %12 : vector<1x32xf32>
    %14 = math.exp %13 : vector<1x32xf32>
    %cst_11 = arith.constant 1.000000e+00 : f32
    %15 = vector.broadcast %cst_11 : f32 to vector<1x32xf32>
    %16 = arith.addf %15, %14 : vector<1x32xf32>
    %17 = arith.divf %15, %16 : vector<1x32xf32>
    %cst_12 = arith.constant 4.000000e-01 : f32
    %18 = vector.broadcast %cst_12 : f32 to vector<1x32xf32>
    %19 = arith.subf %17, %18 : vector<1x32xf32>
    %c0_13 = arith.constant 0 : index
    %c0_14 = arith.constant 0 : index
    %20 = vector.load %arg6[%c0_13, %c0_14] : memref<1x32xf32, #tpu.memory_space<vmem>>, vector<1x32xf32>
    tpu.vector_store %arg6[%c0_13, %c0_14], %19 {strides = array<i32>} : memref<1x32xf32, #tpu.memory_space<vmem>>, vector<1x32xf32>,
    return
  }
  func.func @transform_0(%arg0: i32) -> (i32, i32) {
    %c0_i32 = arith.constant 0 : i32
    %c0_i32_0 = arith.constant 0 : i32
    return %arg0, %c0_i32 : i32, i32
  }
  func.func @transform_1(%arg0: i32) -> (i32, i32) {
    %c0_i32 = arith.constant 0 : i32
    %c0_i32_0 = arith.constant 0 : i32
    %c0_i32_1 = arith.constant 0 : i32
    return %c0_i32, %c0_i32_0 : i32, i32
  }
  func.func @transform_2(%arg0: i32) -> (i32, i32) {
    %c0_i32 = arith.constant 0 : i32
    %c0_i32_0 = arith.constant 0 : i32
    %c0_i32_1 = arith.constant 0 : i32
    return %c0_i32, %c0_i32_0 : i32, i32
  }
  func.func @transform_3(%arg0: i32) -> (i32, i32) {
    %c0_i32 = arith.constant 0 : i32
    %c0_i32_0 = arith.constant 0 : i32
    %c0_i32_1 = arith.constant 0 : i32
    return %c0_i32, %c0_i32_0 : i32, i32
  }
  func.func @transform_4(%arg0: i32) -> (i32, i32) {
    %c0_i32 = arith.constant 0 : i32
    %c0_i32_0 = arith.constant 0 : i32
    %c0_i32_1 = arith.constant 0 : i32
    return %c0_i32, %c0_i32_0 : i32, i32
  }
  func.func @transform_5(%arg0: i32) -> (i32, i32) {
    %c0_i32 = arith.constant 0 : i32
    %c0_i32_0 = arith.constant 0 : i32
    return %arg0, %c0_i32 : i32, i32
  }
}

</mosaic_0001>

<llo_original>
// kernel: tile.13
$region0: #{tile.13}
  #allocation0 [shape = 's32[1]{0}', space=sflag, size = 0x4, scoped, tag = 'scoped memory for tile.13']
  %s0 = inlined_call_operand.vmem [shape: f32[32], index: 0, kind: input, shape index: {}]
  %s1 = inlined_call_operand.vmem [shape: f32[8,32], index: 1, kind: output, shape index: {}]
  // Predicated region
  $region2: #{tile.13} parent=0 // pred_check
    _
  $region3: #{tile.13} parent=0 // pred_check_branch
    %3 = sbr.rel (0) target = $region5
  $region4: #{tile.13} parent=0 // pred_region
    _
  $region5: #{tile.13} parent=0 // pred_fallthru
    _
  %v4 = vld [vmem:[%s0] ss:$0 sm:$0xff]
  %5 = vst [vmem:[%s1] sm:$0xff] %v4

// kernel: tile.14
$region0: #{tile.14}
  %s0 = inlined_call_operand.vmem [shape: f32[8,32], index: 0, kind: input, shape index: {}]
  %s1 = inlined_call_operand.vmem [shape: f32[1,256], index: 1, kind: output, shape index: {}]
  $region1: #{tile.14} parent=0
    #allocation0 [shape = 'u8[8192]{0}', space=vmem, size = 0x2000, scoped, tag = 'scoped mem for output reshape']
    %s2 = smov 3
    %v3 = vld [vmem:[%s0] ss:$4 sm:%s2]
    %vm4 = vcmask 261120
    %5 = vst.msk [vmem:[#allocation0] ss:$8 sm:$0x3] %vm4, %v3
    %s6 = scalar_lea.vmem %s0, 3
    %s7 = smov 3
    %v8 = vld [vmem:[%s6] ss:$4 sm:%s7]
    %9 = vrot.lane.b32.xlu0 %v8, 96
    %v10 = vpop.permute.xlu0 %9
    %vm11 = vcmask 1048320
    %12 = vst.msk [vmem:[#allocation0] ss:$8 sm:$0x3] %vm11, %v10
    %s13 = scalar_lea.vmem %s0, 2
    %s14 = smov 3
    %v15 = vld [vmem:[%s13] ss:$4 sm:%s14]
    %16 = vrot.lane.b32.xlu0 %v15, 64
    %v17 = vpop.permute.xlu0 %16
    %vm18 = vcmask 785920
    %19 = vst.msk [vmem:[#allocation0] ss:$8 sm:$0x3] %vm18, %v17
    %s20 = scalar_lea.vmem %s0, 1
    %s21 = smov 3
    %v22 = vld [vmem:[%s20] ss:$4 sm:%s21]
    %23 = vrot.lane.b32.xlu0 %v22, 32
    %v24 = vpop.permute.xlu0 %23
    %vm25 = vcmask 523520
    %26 = vst.msk [vmem:[#allocation0] ss:$8 sm:$0x3] %vm25, %v24
    %s28 = sshll.u32 1, 1
    %s29 = ssub.s32 %s28, 1
    %v31 = vld [vmem:[#allocation0] sm:%s29]
    %s32 = sshll.u32 1, 1
    %s33 = ssub.s32 %s32, 1
    %34 = vst [vmem:[%s1] sm:%s33] %v31
    %s35 = scalar_lea.vmem [#allocation0], 8
    %v36 = vld [vmem:[%s35] sm:%s29]
    %s37 = sshll.u32 1, 1
    %s38 = ssub.s32 %s37, 1
    %s39 = scalar_lea.vmem %s1, 1
    %40 = vst [vmem:[%s39] sm:%s38] %v36

// kernel: tile.18
$region0: #{tile.18}
  #allocation0 [shape = 's32[1]{0}', space=sflag, size = 0x4, scoped, tag = 'scoped memory for tile.18']
  %s0 = inlined_call_operand.vmem [shape: f32[4], index: 0, kind: input, shape index: {}]
  %s1 = inlined_call_operand.vmem [shape: f32[8,4], index: 1, kind: output, shape index: {}]
  // Predicated region
  $region2: #{tile.18} parent=0 // pred_check
    _
  $region3: #{tile.18} parent=0 // pred_check_branch
    %3 = sbr.rel (0) target = $region5
  $region4: #{tile.18} parent=0 // pred_region
    _
  $region5: #{tile.18} parent=0 // pred_fallthru
    _
  %v4 = vld [vmem:[%s0] ss:$0 sm:$0xff]
  %5 = vst [vmem:[%s1] sm:$0xff] %v4

// kernel: tile.19
$region0: #{tile.19}
  %s0 = inlined_call_operand.vmem [shape: f32[8,4], index: 0, kind: input, shape index: {}]
  %s1 = inlined_call_operand.vmem [shape: f32[1,32], index: 1, kind: output, shape index: {}]
  $region1: #{tile.19} parent=0
    #allocation0 [shape = 'u8[4096]{0}', space=vmem, size = 0x1000, scoped, tag = 'scoped mem for output reshape']
    %v2 = vld [vmem:[%s0] sm:$0x1]
    %vm3 = vcmask 31744
    %4 = vst.msk [vmem:[#allocation0] sm:$0x1] %vm3, %v2
    %s5 = scalar_lea.vmem %s0, 7
    %v6 = vld [vmem:[%s5] sm:$0x1]
    %7 = vrot.lane.b32.xlu0 %v6, 28
    %v8 = vpop.permute.xlu0 %7
    %vm9 = vcmask 261344
    %10 = vst.msk [vmem:[#allocation0] sm:$0x1] %vm9, %v8
    %s11 = scalar_lea.vmem %s0, 6
    %v12 = vld [vmem:[%s11] sm:$0x1]
    %13 = vrot.lane.b32.xlu0 %v12, 24
    %v14 = vpop.permute.xlu0 %13
    %vm15 = vcmask 228544
    %16 = vst.msk [vmem:[#allocation0] sm:$0x1] %vm15, %v14
    %s17 = scalar_lea.vmem %s0, 5
    %v18 = vld [vmem:[%s17] sm:$0x1]
    %19 = vrot.lane.b32.xlu0 %v18, 20
    %v20 = vpop.permute.xlu0 %19
    %vm21 = vcmask 195744
    %22 = vst.msk [vmem:[#allocation0] sm:$0x1] %vm21, %v20
    %s23 = scalar_lea.vmem %s0, 4
    %v24 = vld [vmem:[%s23] sm:$0x1]
    %25 = vrot.lane.b32.xlu0 %v24, 16
    %v26 = vpop.permute.xlu0 %25
    %vm27 = vcmask 162944
    %28 = vst.msk [vmem:[#allocation0] sm:$0x1] %vm27, %v26
    %s29 = scalar_lea.vmem %s0, 3
    %v30 = vld [vmem:[%s29] sm:$0x1]
    %31 = vrot.lane.b32.xlu0 %v30, 12
    %v32 = vpop.permute.xlu0 %31
    %vm33 = vcmask 130144
    %34 = vst.msk [vmem:[#allocation0] sm:$0x1] %vm33, %v32
    %s35 = scalar_lea.vmem %s0, 2
    %v36 = vld [vmem:[%s35] sm:$0x1]
    %37 = vrot.lane.b32.xlu0 %v36, 8
    %v38 = vpop.permute.xlu0 %37
    %vm39 = vcmask 97344
    %40 = vst.msk [vmem:[#allocation0] sm:$0x1] %vm39, %v38
    %s41 = scalar_lea.vmem %s0, 1
    %v42 = vld [vmem:[%s41] sm:$0x1]
    %43 = vrot.lane.b32.xlu0 %v42, 4
    %v44 = vpop.permute.xlu0 %43
    %vm45 = vcmask 64544
    %46 = vst.msk [vmem:[#allocation0] sm:$0x1] %vm45, %v44
    %s48 = sshll.u32 1, 1
    %s49 = ssub.s32 %s48, 1
    %v51 = vld [vmem:[#allocation0] sm:%s49]
    %s52 = sshll.u32 1, 1
    %s53 = ssub.s32 %s52, 1
    %54 = vst [vmem:[%s1] sm:%s53] %v51

// kernel: neural_network_forward.1
$region0: #{neural_network_forward.1}
  #allocation0 [shape = 'u32[]', space=smem, size = 0x4, offset = 0x4, fixed_abs, tag = 'smem constant byte address 0x4 - core index']
  #allocation1 [shape = 'u32[144,128]{1,0:T(1,128)}', space=vmem, size = 0x12000, scoped, tag = 'internal scratch']
  %s0 = inlined_call_operand.vmem [shape: f32[1,128], index: 0, kind: input, shape index: {}]
  %s1 = inlined_call_operand.vmem [shape: bf16[128,256], index: 1, kind: input, shape index: {}]
  %s2 = inlined_call_operand.vmem [shape: f32[1,256], index: 2, kind: input, shape index: {}]
  %s3 = inlined_call_operand.vmem [shape: bf16[256,32], index: 3, kind: input, shape index: {}]
  %s4 = inlined_call_operand.vmem [shape: f32[1,32], index: 4, kind: input, shape index: {}]
  %s5 = inlined_call_operand.vmem [shape: f32[1,32], index: 5, kind: output, shape index: {}]
  %s6 = sld [smem:[#allocation0]]
  $region30: #{neural_network_forward.1} parent=0
    _
  %s8 = ssub.s32 1, %s6
  %s9 = scalar_select 0, %s8, %s6
  // Predicated region
  $region2: #{neural_network_forward.1} parent=0 // pred_check
    _
  $region3: #{neural_network_forward.1} parent=0 // pred_check_branch
    %11 = sbr.rel (0) target = $region5
  $region4: #{neural_network_forward.1} parent=0 // pred_region
    _
  $region5: #{neural_network_forward.1} parent=0 // pred_fallthru
    _
  // Predicated region
  $region6: #{neural_network_forward.1} parent=0 // pred_check
    _
  $region7: #{neural_network_forward.1} parent=0 // pred_check_branch
    %13 = sbr.rel (0) target = $region9
  $region8: #{neural_network_forward.1} parent=0 // pred_region
    _
  $region9: #{neural_network_forward.1} parent=0 // pred_fallthru
    _
  // Predicated region
  $region10: #{neural_network_forward.1} parent=0 // pred_check
    _
  $region11: #{neural_network_forward.1} parent=0 // pred_check_branch
    %15 = sbr.rel (0) target = $region13
  $region12: #{neural_network_forward.1} parent=0 // pred_region
    _
  $region13: #{neural_network_forward.1} parent=0 // pred_fallthru
    _
  // Predicated region
  $region14: #{neural_network_forward.1} parent=0 // pred_check
    _
  $region15: #{neural_network_forward.1} parent=0 // pred_check_branch
    %17 = sbr.rel (0) target = $region17
  $region16: #{neural_network_forward.1} parent=0 // pred_region
    _
  $region17: #{neural_network_forward.1} parent=0 // pred_fallthru
    _
  // Predicated region
  $region18: #{neural_network_forward.1} parent=0 // pred_check
    _
  $region19: #{neural_network_forward.1} parent=0 // pred_check_branch
    %19 = sbr.rel (0) target = $region21
  $region20: #{neural_network_forward.1} parent=0 // pred_region
    _
  $region21: #{neural_network_forward.1} parent=0 // pred_fallthru
    _
  %v21 = vld [vmem:[%s0] sm:$0x1]
  %v22 = vpack.c.bf16 %v21, %v21
  %v23 = vld [vmem:[%s1] sm:$0xff]
  %v24 = vld [vmem:[%s1 + $0x8] sm:$0xff]
  %v25 = vld [vmem:[%s1 + $0x10] sm:$0xff]
  %v26 = vld [vmem:[%s1 + $0x18] sm:$0xff]
  %v27 = vld [vmem:[%s1 + $0x20] sm:$0xff]
  %v28 = vld [vmem:[%s1 + $0x28] sm:$0xff]
  %v29 = vld [vmem:[%s1 + $0x30] sm:$0xff]
  %v30 = vld [vmem:[%s1 + $0x38] sm:$0xff]
  %v31 = vld [vmem:[%s1 + $0x40] sm:$0xff]
  %v32 = vld [vmem:[%s1 + $0x48] sm:$0xff]
  %v33 = vld [vmem:[%s1 + $0x50] sm:$0xff]
  %v34 = vld [vmem:[%s1 + $0x58] sm:$0xff]
  %v35 = vld [vmem:[%s1 + $0x60] sm:$0xff]
  %v36 = vld [vmem:[%s1 + $0x68] sm:$0xff]
  %v37 = vld [vmem:[%s1 + $0x70] sm:$0xff]
  %v38 = vld [vmem:[%s1 + $0x78] sm:$0xff]
  %v39 = vld [vmem:[%s2] sm:$0x3]
  %v56 = vunpack.c.l.b16 %v23
  %v57 = vunpack.c.h.b16 %v23
  %v58 = vunpack.c.l.b16 %v24
  %v59 = vunpack.c.h.b16 %v24
  %v60 = vunpack.c.l.b16 %v25
  %v61 = vunpack.c.h.b16 %v25
  %v62 = vunpack.c.l.b16 %v26
  %v63 = vunpack.c.h.b16 %v26
  %v64 = vunpack.c.l.b16 %v27
  %v65 = vunpack.c.h.b16 %v27
  %v66 = vunpack.c.l.b16 %v28
  %v67 = vunpack.c.h.b16 %v28
  %v68 = vunpack.c.l.b16 %v29
  %v69 = vunpack.c.h.b16 %v29
  %v70 = vunpack.c.l.b16 %v30
  %v71 = vunpack.c.h.b16 %v30
  %v72 = vunpack.c.l.b16 %v31
  %v73 = vunpack.c.h.b16 %v31
  %v74 = vunpack.c.l.b16 %v32
  %v75 = vunpack.c.h.b16 %v32
  %v76 = vunpack.c.l.b16 %v33
  %v77 = vunpack.c.h.b16 %v33
  %v78 = vunpack.c.l.b16 %v34
  %v79 = vunpack.c.h.b16 %v34
  %v80 = vunpack.c.l.b16 %v35
  %v81 = vunpack.c.h.b16 %v35
  %v82 = vunpack.c.l.b16 %v36
  %v83 = vunpack.c.h.b16 %v36
  %v84 = vunpack.c.l.b16 %v37
  %v85 = vunpack.c.h.b16 %v37
  %v86 = vunpack.c.l.b16 %v38
  %v87 = vunpack.c.h.b16 %v38
  %v88 = vpack.c.b16 %v58, %v56
  %v89 = vpack.c.b16 %v59, %v57
  %v90 = vpack.c.b16 %v62, %v60
  %v91 = vpack.c.b16 %v63, %v61
  %v92 = vpack.c.b16 %v66, %v64
  %v93 = vpack.c.b16 %v67, %v65
  %v94 = vpack.c.b16 %v70, %v68
  %v95 = vpack.c.b16 %v71, %v69
  %v96 = vpack.c.b16 %v74, %v72
  %v97 = vpack.c.b16 %v75, %v73
  %v98 = vpack.c.b16 %v78, %v76
  %v99 = vpack.c.b16 %v79, %v77
  %v100 = vpack.c.b16 %v82, %v80
  %v101 = vpack.c.b16 %v83, %v81
  %v102 = vpack.c.b16 %v86, %v84
  %v103 = vpack.c.b16 %v87, %v85
  %v121 = vlaneseq
  %v122 = vshrl.u32 %v121, 7
  %v123 = vsub.s32 0, %v122
  %v124 = vrot.slane %v39, %v123
  %v125 = vlaneseq
  %v126 = vshrl.u32 %v125, 7
  %v127 = vsub.s32 1, %v126
  %v128 = vrot.slane %v39, %v127
  %131 = vmatprep.subr.bf16.mxu0 %v103
  %132 = vmatpush1.bf16.msra.mxu0 %v102
  %133 = vmatprep.subr.bf16.mxu0 %v101
  %134 = vmatpush1.bf16.msra.mxu0 %v100
  %135 = vmatprep.subr.bf16.mxu0 %v99
  %136 = vmatpush1.bf16.msra.mxu0 %v98
  %137 = vmatprep.subr.bf16.mxu0 %v97
  %138 = vmatpush1.bf16.msra.mxu0 %v96
  %139 = vmatprep.subr.bf16.mxu0 %v95
  %140 = vmatpush1.bf16.msra.mxu0 %v94
  %141 = vmatprep.subr.bf16.mxu0 %v93
  %142 = vmatpush1.bf16.msra.mxu0 %v92
  %143 = vmatprep.subr.bf16.mxu0 %v91
  %144 = vmatpush1.bf16.msra.mxu0 %v90
  %145 = vmatprep.subr.bf16.mxu0 %v89
  %146 = vmatpush1.bf16.msra.mxu0 %v88
  %147 = vmatprep.subr.bf16.mxu0 0
  %148 = vmatpush2.bf16.msra.mxu0 0
  %149 = vmatprep.subr.bf16.mxu0 0
  %150 = vmatpush2.bf16.msra.mxu0 0
  %151 = vmatprep.subr.bf16.mxu0 0
  %152 = vmatpush2.bf16.msra.mxu0 0
  %153 = vmatprep.subr.bf16.mxu0 0
  %154 = vmatpush2.bf16.msra.mxu0 0
  %155 = vmatprep.subr.bf16.mxu0 0
  %156 = vmatpush2.bf16.msra.mxu0 0
  %157 = vmatprep.subr.bf16.mxu0 0
  %158 = vmatpush2.bf16.msra.mxu0 0
  %159 = vmatprep.subr.bf16.mxu0 0
  %160 = vmatpush2.bf16.msra.mxu0 0
  %161 = vmatprep.subr.bf16.mxu0 0
  %162 = vmatpush2.bf16.msra.mxu0 0
  %163 = vmatprep.mubr.bf16.mxu0 0
  %164 = vmatmul.mubr.bf16.gmra.mxu0 %v22
  %v165 = vpop.f32.mrf.mxu0
  %v166 = vadd.f32 %v124, %v165
  %v167 = vpop.f32.mrf.mxu0
  %v168 = vadd.f32 %v128, %v167
  %v169 = vpop.f32.mrf.mxu0
  %v170 = vpop.f32.mrf.mxu0
  %171 = vdwg.mxu0
  %v172 = vmax.f32 %v166, 0.0
  %v173 = vmax.f32 %v168, 0.0
  %v174 = vpack.c.bf16 %v172, %v172
  %v175 = vpack.c.bf16 %v173, %v173
  %v176 = vld [vmem:[%s3] sm:$0xf]
  %v177 = vld [vmem:[%s3 + $0x4] sm:$0xf]
  %v178 = vld [vmem:[%s3 + $0x8] sm:$0xf]
  %v179 = vld [vmem:[%s3 + $0xc] sm:$0xf]
  %v180 = vld [vmem:[%s3 + $0x10] sm:$0xf]
  %v181 = vld [vmem:[%s3 + $0x14] sm:$0xf]
  %v182 = vld [vmem:[%s3 + $0x18] sm:$0xf]
  %v183 = vld [vmem:[%s3 + $0x1c] sm:$0xf]
  %v184 = vld [vmem:[%s3 + $0x20] sm:$0xf]
  %v185 = vld [vmem:[%s3 + $0x24] sm:$0xf]
  %v186 = vld [vmem:[%s3 + $0x28] sm:$0xf]
  %v187 = vld [vmem:[%s3 + $0x2c] sm:$0xf]
  %v188 = vld [vmem:[%s3 + $0x30] sm:$0xf]
  %v189 = vld [vmem:[%s3 + $0x34] sm:$0xf]
  %v190 = vld [vmem:[%s3 + $0x38] sm:$0xf]
  %v191 = vld [vmem:[%s3 + $0x3c] sm:$0xf]
  %v192 = vld [vmem:[%s3 + $0x40] sm:$0xf]
  %v193 = vld [vmem:[%s3 + $0x44] sm:$0xf]
  %v194 = vld [vmem:[%s3 + $0x48] sm:$0xf]
  %v195 = vld [vmem:[%s3 + $0x4c] sm:$0xf]
  %v196 = vld [vmem:[%s3 + $0x50] sm:$0xf]
  %v197 = vld [vmem:[%s3 + $0x54] sm:$0xf]
  %v198 = vld [vmem:[%s3 + $0x58] sm:$0xf]
  %v199 = vld [vmem:[%s3 + $0x5c] sm:$0xf]
  %v200 = vld [vmem:[%s3 + $0x60] sm:$0xf]
  %v201 = vld [vmem:[%s3 + $0x64] sm:$0xf]
  %v202 = vld [vmem:[%s3 + $0x68] sm:$0xf]
  %v203 = vld [vmem:[%s3 + $0x6c] sm:$0xf]
  %v204 = vld [vmem:[%s3 + $0x70] sm:$0xf]
  %v205 = vld [vmem:[%s3 + $0x74] sm:$0xf]
  %v206 = vld [vmem:[%s3 + $0x78] sm:$0xf]
  %v207 = vld [vmem:[%s3 + $0x7c] sm:$0xf]
  %v208 = vld [vmem:[%s4] sm:$0x1]
  %v241 = vunpack.c.l.b16 %v176
  %v242 = vunpack.c.l.b16 %v177
  %v243 = vunpack.c.l.b16 %v178
  %v244 = vunpack.c.l.b16 %v179
  %v245 = vunpack.c.l.b16 %v180
  %v246 = vunpack.c.l.b16 %v181
  %v247 = vunpack.c.l.b16 %v182
  %v248 = vunpack.c.l.b16 %v183
  %v249 = vunpack.c.l.b16 %v184
  %v250 = vunpack.c.l.b16 %v185
  %v251 = vunpack.c.l.b16 %v186
  %v252 = vunpack.c.l.b16 %v187
  %v253 = vunpack.c.l.b16 %v188
  %v254 = vunpack.c.l.b16 %v189
  %v255 = vunpack.c.l.b16 %v190
  %v256 = vunpack.c.l.b16 %v191
  %v257 = vunpack.c.l.b16 %v192
  %v258 = vunpack.c.l.b16 %v193
  %v259 = vunpack.c.l.b16 %v194
  %v260 = vunpack.c.l.b16 %v195
  %v261 = vunpack.c.l.b16 %v196
  %v262 = vunpack.c.l.b16 %v197
  %v263 = vunpack.c.l.b16 %v198
  %v264 = vunpack.c.l.b16 %v199
  %v265 = vunpack.c.l.b16 %v200
  %v266 = vunpack.c.l.b16 %v201
  %v267 = vunpack.c.l.b16 %v202
  %v268 = vunpack.c.l.b16 %v203
  %v269 = vunpack.c.l.b16 %v204
  %v270 = vunpack.c.l.b16 %v205
  %v271 = vunpack.c.l.b16 %v206
  %v272 = vunpack.c.l.b16 %v207
  %v273 = vpack.c.b16 %v242, %v241
  %v274 = vpack.c.b16 %v244, %v243
  %v275 = vpack.c.b16 %v246, %v245
  %v276 = vpack.c.b16 %v248, %v247
  %v277 = vpack.c.b16 %v250, %v249
  %v278 = vpack.c.b16 %v252, %v251
  %v279 = vpack.c.b16 %v254, %v253
  %v280 = vpack.c.b16 %v256, %v255
  %v281 = vpack.c.b16 %v258, %v257
  %v282 = vpack.c.b16 %v260, %v259
  %v283 = vpack.c.b16 %v262, %v261
  %v284 = vpack.c.b16 %v264, %v263
  %v285 = vpack.c.b16 %v266, %v265
  %v286 = vpack.c.b16 %v268, %v267
  %v287 = vpack.c.b16 %v270, %v269
  %v288 = vpack.c.b16 %v272, %v271
  %305 = vmatprep.subr.bf16.mxu0 0
  %306 = vmatpush1.bf16.msra.mxu0 %v280
  %307 = vmatprep.subr.bf16.mxu0 0
  %308 = vmatpush1.bf16.msra.mxu0 %v279
  %309 = vmatprep.subr.bf16.mxu0 0
  %310 = vmatpush1.bf16.msra.mxu0 %v278
  %311 = vmatprep.subr.bf16.mxu0 0
  %312 = vmatpush1.bf16.msra.mxu0 %v277
  %313 = vmatprep.subr.bf16.mxu0 0
  %314 = vmatpush1.bf16.msra.mxu0 %v276
  %315 = vmatprep.subr.bf16.mxu0 0
  %316 = vmatpush1.bf16.msra.mxu0 %v275
  %317 = vmatprep.subr.bf16.mxu0 0
  %318 = vmatpush1.bf16.msra.mxu0 %v274
  %319 = vmatprep.subr.bf16.mxu0 0
  %320 = vmatpush1.bf16.msra.mxu0 %v273
  %321 = vmatprep.subr.bf16.mxu0 0
  %322 = vmatpush2.bf16.msra.mxu0 %v288
  %323 = vmatprep.subr.bf16.mxu0 0
  %324 = vmatpush2.bf16.msra.mxu0 %v287
  %325 = vmatprep.subr.bf16.mxu0 0
  %326 = vmatpush2.bf16.msra.mxu0 %v286
  %327 = vmatprep.subr.bf16.mxu0 0
  %328 = vmatpush2.bf16.msra.mxu0 %v285
  %329 = vmatprep.subr.bf16.mxu0 0
  %330 = vmatpush2.bf16.msra.mxu0 %v284
  %331 = vmatprep.subr.bf16.mxu0 0
  %332 = vmatpush2.bf16.msra.mxu0 %v283
  %333 = vmatprep.subr.bf16.mxu0 0
  %334 = vmatpush2.bf16.msra.mxu0 %v282
  %335 = vmatprep.subr.bf16.mxu0 0
  %336 = vmatpush2.bf16.msra.mxu0 %v281
  %337 = vmatprep.mubr.bf16.mxu0 %v175
  %338 = vmatmul.mubr.bf16.gmra.mxu0 %v174
  %v339 = vpop.f32.mrf.mxu0
  %v340 = vadd.f32 %v208, %v339
  %v341 = vpop.f32.mrf.mxu0
  %v342 = vpop.f32.mrf.mxu0
  %v343 = vpop.f32.mrf.mxu0
  %344 = vdwg.mxu0
  %v345 = vxor.u32 %v340, 2147483648
  %v346 = vmul.f32 %v345, 1.442695
  %v347 = vpow.pop %v346
  %v348 = vadd.f32 %v347, 1.0
  %v349 = vrcp.pop %v348
  %v350 = vmul.f32 1.0, %v349
  %v351 = vsub.f32 %v350, 0.4
  %vm352 = vcmask 253952
  %353 = vst.msk [vmem:[%s5] sm:$0x1] %vm352, %v351
  // Predicated region
  $region22: #{neural_network_forward.1} parent=0 // pred_check
    _
  $region23: #{neural_network_forward.1} parent=0 // pred_check_branch
    %355 = sbr.rel (0) target = $region25
  $region24: #{neural_network_forward.1} parent=0 // pred_region
    _
  $region25: #{neural_network_forward.1} parent=0 // pred_fallthru
    _
  // Predicated region
  $region26: #{neural_network_forward.1} parent=0 // pred_check
    _
  $region27: #{neural_network_forward.1} parent=0 // pred_check_branch
    %357 = sbr.rel (0) target = $region29
  $region28: #{neural_network_forward.1} parent=0 // pred_region
    _
  $region29: #{neural_network_forward.1} parent=0 // pred_fallthru
    _

</llo_original>
